<compile_context>
chip_gen: v5e
topology: v5e:2x2
jax: 0.10.0
libtpu: 0.0.40
codegen_flags: <defaults>
</compile_context>

<pallas_src>
import functools

import jax
import jax.numpy as jnp
from jax.experimental import pallas as pl
from jax.experimental.pallas import tpu as pltpu

_LP = 128                 # lane width of every 2-D tile
_HIDDEN = 64              # hidden width of the MLP (fixed by the module)
_MAX_TB = 2048            # max batch rows per grid step (~1 MiB f32 output tile)
_SINGLE_TILE_ROWS = 512   # at/below this, a single grid step (per-step overhead dominates)


def _round_up(v, m):
    return ((v + m - 1) // m) * m


def _encoder_z_kernel(*refs, dim_in, dim_out, r1, use_bf16, inkernel_rng):
    """Refs: ([seed,] x, params, [noise,] out).

    x:      [TB, dim_in]      lane-unpadded activations
    params: [r1 + 416, 128]   packed (W1|b1|W2|b2|W3_mu|b3_mu|W3_lv|b3_lv)
    noise:  [TB, dim_out]     (only when inkernel_rng=False)
    out:    [TB, 128]         mu @ lanes [0:d), logvar @ [d:2d), sample @ [2d:3d)
    """
    if inkernel_rng:
        seed_ref, x_ref, p_ref, out_ref = refs
        noise_ref = None
    else:
        x_ref, p_ref, noise_ref, out_ref = refs

    f32 = jnp.float32
    cdt = jnp.bfloat16 if use_bf16 else jnp.float32

    # Static, sublane-aligned row offsets inside the packed param slab.
    o_b1 = r1
    o_w2 = r1 + 8
    o_b2 = r1 + 136
    o_w3m = r1 + 144
    o_b3m = r1 + 272
    o_w3l = r1 + 280
    o_b3l = r1 + 408

    def dense(h, w_off, w_rows, b_off):
        w = p_ref[w_off:w_off + w_rows, :]            # already in matmul dtype
        b = p_ref[b_off:b_off + 1, :].astype(f32)     # [1,128] bias row (sublane bcast)
        y = jnp.dot(h.astype(cdt), w, preferred_element_type=f32)
        return y + b

    x = x_ref[...]                                     # [TB, dim_in]
    h1 = jnp.maximum(dense(x, 0, dim_in, o_b1), 0.0)   # [TB, 128], data in lanes [0:64)
    h2 = jnp.maximum(dense(h1, o_w2, _LP, o_b2), 0.0)  # [TB, 128], data in lanes [0:64)
    mu = dense(h2, o_w3m, _LP, o_b3m)                  # [TB, 128], data in lanes [0:d)
    logvar = dense(h2, o_w3l, _LP, o_b3l)              # [TB, 128], data in lanes [0:d)

    if inkernel_rng:
        pltpu.prng_seed(seed_ref[0] + pl.program_id(0))
        noise = pltpu.stateful_normal((x_ref.shape[0], _LP), f32)[:, :dim_out]
    else:
        noise = noise_ref[...]                         # [TB, dim_out]

    sample = noise * jnp.exp(0.5 * logvar[:, :dim_out]) + mu[:, :dim_out]

    # Lane-packed output: padded lanes of mu/logvar are exact zeros, so the
    # rolled logvar lands in a disjoint lane range.  One full-width lane-dense
    # store + one narrow VMEM-only insert; the HBM writeback stays 128-lane dense.
    out_ref[...] = mu + pltpu.roll(logvar, dim_out, axis=1)
    out_ref[:, 2 * dim_out:3 * dim_out] = sample


def _pack_params(params, dim_in, dim_out, dtype):
    """Pack (W1,b1,W2,b2,W3_mu,b3_mu,W3_lv,b3_lv) into one [r1+416, 128] slab."""
    r1 = _round_up(dim_in, 8)

    def pad_w(w, nrows):
        out = jnp.zeros((nrows, _LP), jnp.float32)
        return out.at[:w.shape[0], :w.shape[1]].set(w.astype(jnp.float32))

    def pad_b(b):
        b = jnp.reshape(b, (-1,)).astype(jnp.float32)
        out = jnp.zeros((8, _LP), jnp.float32)
        return out.at[0, :b.shape[0]].set(b)

    w3 = params["w3"]
    b3 = jnp.reshape(params["b3"], (-1,))
    blocks = [
        pad_w(params["w1"], r1), pad_b(params["b1"]),
        pad_w(params["w2"], _LP), pad_b(params["b2"]),
        pad_w(w3[:, :dim_out], _LP), pad_b(b3[:dim_out]),
        pad_w(w3[:, dim_out:], _LP), pad_b(b3[dim_out:]),
    ]
    return jnp.concatenate(blocks, axis=0).astype(dtype)   # [r1 + 416, 128]


def encoder_z_forward(x, params, noise=None, *, use_bf16_matmul=False,
                      use_inkernel_rng=False, rng_seed=0):
    """EncoderZ forward pass.

    x:      [B, dim_in] float32
    params: dict with w1 [dim_in,64], b1 [*,64], w2 [64,64], b2 [*,64],
            w3 [64, 2*dim_out], b3 [*, 2*dim_out]  (weights stored transposed
            w.r.t. torch.nn.Linear, i.e. y = x @ W + b)
    noise:  [B, dim_out] float32 standard normals (ignored if use_inkernel_rng)
    returns (mu, logvar, sample), each [B, dim_out] float32
    """
    B, dim_in = x.shape
    two_dim_out = params["w3"].shape[1]
    dim_out = two_dim_out // 2
    assert 3 * dim_out <= _LP, "lane-packed output needs 3*dim_out <= 128"
    if not use_inkernel_rng:
        assert noise is not None and noise.shape == (B, dim_out)

    r1 = _round_up(dim_in, 8)
    p_dtype = jnp.bfloat16 if use_bf16_matmul else jnp.float32
    packed = _pack_params(params, dim_in, dim_out, p_dtype)

    # Batch tiling: one block for small B; for larger B use <=_MAX_TB rows and
    # >=2 grid steps so the "parallel" axis shards across v7x's two TensorCores.
    if B <= _SINGLE_TILE_ROWS:
        tb = B                                    # block == full extent (always legal)
    else:
        tb = min(_MAX_TB, _round_up(pl.cdiv(B, 2), 8))
    grid_n = pl.cdiv(B, tb)
    rows = grid_n * tb                            # output rows (>= B, trimmed below)

    kernel = functools.partial(
        _encoder_z_kernel, dim_in=dim_in, dim_out=dim_out, r1=r1,
        use_bf16=use_bf16_matmul, inkernel_rng=use_inkernel_rng)

    x_spec = pl.BlockSpec((tb, dim_in), lambda i: (i, 0))      # lane dim = full extent
    p_spec = pl.BlockSpec((r1 + 416, _LP), lambda i: (0, 0))   # VMEM-resident weights
    out_spec = pl.BlockSpec((tb, _LP), lambda i: (i, 0))       # fused lane-packed output

    if use_inkernel_rng:
        in_specs = [pl.BlockSpec(memory_space=pltpu.MemorySpace.SMEM), x_spec, p_spec]
        inputs = (jnp.asarray([rng_seed], jnp.int32), x, packed)
        noise_bytes = 0
    else:
        n_spec = pl.BlockSpec((tb, dim_out), lambda i: (i, 0))  # lane dim = full extent
        in_specs = [x_spec, p_spec, n_spec]
        inputs = (x, packed, noise)
        noise_bytes = noise.size * noise.dtype.itemsize

    cost = pl.CostEstimate(
        flops=int(2 * rows * (dim_in * _LP + _LP * _LP + 2 * _LP * _LP)),
        transcendentals=int(rows * dim_out),
        bytes_accessed=int(x.size * x.dtype.itemsize
                           + packed.size * packed.dtype.itemsize
                           + noise_bytes + rows * _LP * 4))

    out = pl.pallas_call(
        kernel,
        out_shape=jax.ShapeDtypeStruct((rows, _LP), jnp.float32),
        grid=(grid_n,),
        in_specs=in_specs,
        out_specs=out_spec,
        compiler_params=pltpu.CompilerParams(
            dimension_semantics=("parallel",),
            vmem_limit_bytes=32 * 1024 * 1024),
        cost_estimate=cost,
    )(*inputs)

    mu = out[:B, :dim_out]
    logvar = out[:B, dim_out:2 * dim_out]
    sample = out[:B, 2 * dim_out:3 * dim_out]
    return mu, logvar, sample


def init_params(key, dim_in, dim_out, hidden=_HIDDEN):
    """Deterministic synthetic init matching the nn.Linear stack (transposed W)."""
    ks = jax.random.split(key, 6)
    s1 = 1.0 / jnp.sqrt(dim_in)
    s2 = 1.0 / jnp.sqrt(hidden)
    u = lambda k, shape, s: jax.random.uniform(k, shape, jnp.float32, -s, s)
    return {
        "w1": u(ks[0], (dim_in, hidden), s1), "b1": u(ks[1], (1, hidden), s1),
        "w2": u(ks[2], (hidden, hidden), s2), "b2": u(ks[3], (1, hidden), s2),
        "w3": u(ks[4], (hidden, 2 * dim_out), s2), "b3": u(ks[5], (1, 2 * dim_out), s2),
    }


if __name__ == "__main__":
    key = jax.random.PRNGKey(0)
    k_x, k_p, k_n = jax.random.split(key, 3)

    B, dim_in, dim_out = 8, 32, 16

    x = jax.random.normal(k_x, (B, dim_in), jnp.float32)
    params = init_params(k_p, dim_in, dim_out)
    # TODO(synk): torch.randn_like is realized host-side (noise passed in) so the
    # reference check stays bit-comparable; set use_inkernel_rng=True to draw it
    # on-chip with pltpu.prng_seed + pltpu.stateful_normal instead.
    noise = jax.random.normal(k_n, (B, dim_out), jnp.float32)

    mu, logvar, sample = encoder_z_forward(x, params, noise)
    jax.block_until_ready((mu, logvar, sample))

    # Pure-JAX reference.
    h1 = jnp.maximum(x @ params["w1"] + params["b1"], 0.0)
    h2 = jnp.maximum(h1 @ params["w2"] + params["b2"], 0.0)
    out = h2 @ params["w3"] + params["b3"]
    mu_ref, logvar_ref = out[:, :dim_out], out[:, dim_out:]
    sample_ref = noise * jnp.exp(0.5 * logvar_ref) + mu_ref

    assert jnp.allclose(mu, mu_ref, atol=2e-5, rtol=2e-5)
    assert jnp.allclose(logvar, logvar_ref, atol=2e-5, rtol=2e-5)
    assert jnp.allclose(sample, sample_ref, atol=2e-5, rtol=2e-5)

    # bf16-weight path: bf16 MXU inputs with f32 accumulation -> looser tolerance.
    mu_b, logvar_b, sample_b = encoder_z_forward(x, params, noise,
                                                 use_bf16_matmul=True)
    jax.block_until_ready((mu_b, logvar_b, sample_b))
    assert jnp.allclose(mu_b, mu_ref, atol=2e-2, rtol=2e-2)
    assert jnp.allclose(logvar_b, logvar_ref, atol=2e-2, rtol=2e-2)
    assert jnp.allclose(sample_b, sample_ref, atol=2e-2, rtol=2e-2)

    print("KERNEL_OK")
</pallas_src>

<mosaic_0001>
module attributes {stable_mosaic.version = 11 : i64} {
  func.func @_encoder_z_kernel(%arg0: i32, %arg1: memref<8x32xf32, #tpu.memory_space<vmem>>, %arg2: memref<448x128xf32, #tpu.memory_space<vmem>>, %arg3: memref<8x16xf32, #tpu.memory_space<vmem>>, %arg4: memref<8x128xf32, #tpu.memory_space<vmem>>) attributes {dimension_semantics = [#tpu.dimension_semantics<parallel>], iteration_bounds = array<i64: 1>, scalar_prefetch = 0 : i64, scratch_operands = 0 : i64, tpu.core_type = #tpu.core_type<tc>, window_params = [{transform_indices = @transform_0, window_bounds = array<i64: 8, 32>}, {pipeline_mode = #tpu.pipeline_mode<synchronous>, transform_indices = @transform_1, window_bounds = array<i64: 448, 128>}, {transform_indices = @transform_2, window_bounds = array<i64: 8, 16>}, {transform_indices = @transform_3, window_bounds = array<i64: 8, 128>}]} {
    %c0 = arith.constant 0 : index
    %c0_0 = arith.constant 0 : index
    %0 = vector.load %arg1[%c0, %c0_0] : memref<8x32xf32, #tpu.memory_space<vmem>>, vector<8x32xf32>
    %c0_1 = arith.constant 0 : index
    %c0_2 = arith.constant 0 : index
    %1 = vector.load %arg2[%c0_1, %c0_2] : memref<448x128xf32, #tpu.memory_space<vmem>>, vector<32x128xf32>
    %c32 = arith.constant 32 : index
    %c0_3 = arith.constant 0 : index
    %2 = vector.load %arg2[%c32, %c0_3] : memref<448x128xf32, #tpu.memory_space<vmem>>, vector<1x128xf32>
    %cst = arith.constant dense<0.000000e+00> : vector<8x128xf32>
    %3 = tpu.matmul %0, %1, %cst {dimension_numbers = #tpu.dot_dimension_numbers<[1], [0], [0], [1], [0, 0, 1, 1], [], []>} : vector<8x32xf32>, vector<32x128xf32>, vector<8x128xf32> -> vector<8x128xf32>
    %4 = vector.broadcast %2 : vector<1x128xf32> to vector<8x128xf32>
    %5 = arith.addf %3, %4 : vector<8x128xf32>
    %cst_4 = arith.constant 0.000000e+00 : f32
    %6 = vector.broadcast %cst_4 : f32 to vector<8x128xf32>
    %7 = arith.maximumf %5, %6 : vector<8x128xf32>
    %c40 = arith.constant 40 : index
    %c0_5 = arith.constant 0 : index
    %8 = vector.load %arg2[%c40, %c0_5] : memref<448x128xf32, #tpu.memory_space<vmem>>, vector<128x128xf32>
    %c168 = arith.constant 168 : index
    %c0_6 = arith.constant 0 : index
    %9 = vector.load %arg2[%c168, %c0_6] : memref<448x128xf32, #tpu.memory_space<vmem>>, vector<1x128xf32>
    %cst_7 = arith.constant dense<0.000000e+00> : vector<8x128xf32>
    %10 = tpu.matmul %7, %8, %cst_7 {dimension_numbers = #tpu.dot_dimension_numbers<[1], [0], [0], [1], [0, 0, 1, 1], [], []>} : vector<8x128xf32>, vector<128x128xf32>, vector<8x128xf32> -> vector<8x128xf32>
    %11 = vector.broadcast %9 : vector<1x128xf32> to vector<8x128xf32>
    %12 = arith.addf %10, %11 : vector<8x128xf32>
    %cst_8 = arith.constant 0.000000e+00 : f32
    %13 = vector.broadcast %cst_8 : f32 to vector<8x128xf32>
    %14 = arith.maximumf %12, %13 : vector<8x128xf32>
    %c176 = arith.constant 176 : index
    %c0_9 = arith.constant 0 : index
    %15 = vector.load %arg2[%c176, %c0_9] : memref<448x128xf32, #tpu.memory_space<vmem>>, vector<128x128xf32>
    %c304 = arith.constant 304 : index
    %c0_10 = arith.constant 0 : index
    %16 = vector.load %arg2[%c304, %c0_10] : memref<448x128xf32, #tpu.memory_space<vmem>>, vector<1x128xf32>
    %cst_11 = arith.constant dense<0.000000e+00> : vector<8x128xf32>
    %17 = tpu.matmul %14, %15, %cst_11 {dimension_numbers = #tpu.dot_dimension_numbers<[1], [0], [0], [1], [0, 0, 1, 1], [], []>} : vector<8x128xf32>, vector<128x128xf32>, vector<8x128xf32> -> vector<8x128xf32>
    %18 = vector.broadcast %16 : vector<1x128xf32> to vector<8x128xf32>
    %19 = arith.addf %17, %18 : vector<8x128xf32>
    %c312 = arith.constant 312 : index
    %c0_12 = arith.constant 0 : index
    %20 = vector.load %arg2[%c312, %c0_12] : memref<448x128xf32, #tpu.memory_space<vmem>>, vector<128x128xf32>
    %c440 = arith.constant 440 : index
    %c0_13 = arith.constant 0 : index
    %21 = vector.load %arg2[%c440, %c0_13] : memref<448x128xf32, #tpu.memory_space<vmem>>, vector<1x128xf32>
    %cst_14 = arith.constant dense<0.000000e+00> : vector<8x128xf32>
    %22 = tpu.matmul %14, %20, %cst_14 {dimension_numbers = #tpu.dot_dimension_numbers<[1], [0], [0], [1], [0, 0, 1, 1], [], []>} : vector<8x128xf32>, vector<128x128xf32>, vector<8x128xf32> -> vector<8x128xf32>
    %23 = vector.broadcast %21 : vector<1x128xf32> to vector<8x128xf32>
    %24 = arith.addf %22, %23 : vector<8x128xf32>
    %c0_15 = arith.constant 0 : index
    %c0_16 = arith.constant 0 : index
    %25 = vector.load %arg3[%c0_15, %c0_16] : memref<8x16xf32, #tpu.memory_space<vmem>>, vector<8x16xf32>
    %26 = vector.extract_strided_slice %24 {offsets = [0, 0], sizes = [8, 16], strides = [1, 1]} : vector<8x128xf32> to vector<8x16xf32>
    %cst_17 = arith.constant 5.000000e-01 : f32
    %27 = vector.broadcast %cst_17 : f32 to vector<8x16xf32>
    %28 = arith.mulf %27, %26 : vector<8x16xf32>
    %29 = math.exp %28 : vector<8x16xf32>
    %30 = arith.mulf %25, %29 : vector<8x16xf32>
    %31 = vector.extract_strided_slice %19 {offsets = [0, 0], sizes = [8, 16], strides = [1, 1]} : vector<8x128xf32> to vector<8x16xf32>
    %32 = arith.addf %30, %31 : vector<8x16xf32>
    %c16_i32 = arith.constant 16 : i32
    %33 = tpu.dynamic_rotate %24 by %c16_i32 dim 1 : vector<8x128xf32>, i32 -> vector<8x128xf32>
    %34 = arith.addf %19, %33 : vector<8x128xf32>
    %c0_18 = arith.constant 0 : index
    %c0_19 = arith.constant 0 : index
    %35 = vector.load %arg4[%c0_18, %c0_19] : memref<8x128xf32, #tpu.memory_space<vmem>>, vector<8x128xf32>
    tpu.vector_store %arg4[%c0_18, %c0_19], %34 {strides = array<i32>} : memref<8x128xf32, #tpu.memory_space<vmem>>, vector<8x128xf32>,
    %c0_20 = arith.constant 0 : index
    %c32_21 = arith.constant 32 : index
    %36 = vector.load %arg4[%c0_20, %c32_21] : memref<8x128xf32, #tpu.memory_space<vmem>>, vector<8x16xf32>
    tpu.vector_store %arg4[%c0_20, %c32_21], %32 {strides = array<i32>} : memref<8x128xf32, #tpu.memory_space<vmem>>, vector<8x16xf32>,
    return
  }
  func.func @transform_0(%arg0: i32) -> (i32, i32) {
    %c0_i32 = arith.constant 0 : i32
    %c0_i32_0 = arith.constant 0 : i32
    return %arg0, %c0_i32 : i32, i32
  }
  func.func @transform_1(%arg0: i32) -> (i32, i32) {
    %c0_i32 = arith.constant 0 : i32
    %c0_i32_0 = arith.constant 0 : i32
    %c0_i32_1 = arith.constant 0 : i32
    return %c0_i32, %c0_i32_0 : i32, i32
  }
  func.func @transform_2(%arg0: i32) -> (i32, i32) {
    %c0_i32 = arith.constant 0 : i32
    %c0_i32_0 = arith.constant 0 : i32
    return %arg0, %c0_i32 : i32, i32
  }
  func.func @transform_3(%arg0: i32) -> (i32, i32) {
    %c0_i32 = arith.constant 0 : i32
    %c0_i32_0 = arith.constant 0 : i32
    return %arg0, %c0_i32 : i32, i32
  }
}

</mosaic_0001>

<llo_original>
// kernel: tpu_custom_call.1
$region0: #{tpu_custom_call.1}
  #allocation0 [shape = 'u32[]', space=smem, size = 0x4, offset = 0x4, fixed_abs, tag = 'smem constant byte address 0x4 - core index']
  #allocation1 [shape = 'u32[72,128]{1,0:T(1,128)}', space=vmem, size = 0x9000, scoped, tag = 'internal scratch']
  %s0 = inlined_call_operand.hbm [shape: f32[8,32], index: 0, kind: input, shape index: {}]
  %s1 = inlined_call_operand.hbm [shape: f32[448,128], index: 1, kind: input, shape index: {}]
  %s2 = inlined_call_operand.hbm [shape: f32[8,16], index: 2, kind: input, shape index: {}]
  %s3 = inlined_call_operand.hbm [shape: f32[8,128], index: 3, kind: output, shape index: {}]
  %s4 = sld [smem:[#allocation0]]
  $region34: #{tpu_custom_call.1} parent=0
    _
  %s6 = ssub.s32 1, %s4
  %s7 = scalar_select 0, %s6, %s4
  $region1: #{tpu_custom_call.1} parent=0
    #allocation2 [shape = 'u8[4096]{0}', space=vmem, size = 0x1000, scoped, tag = 'input window, operand 0, single buffered']
    #allocation3 [shape = 's32[1]{0}', space=sflag, size = 0x4, scoped, tag = 'scoped memory for tpu_custom_call.1']
    #allocation4 [shape = 's32[1]{0}', space=sflag, size = 0x4, scoped, tag = 'scoped memory for tpu_custom_call.1']
    #allocation5 [shape = 'u8[229376]{0}', space=vmem, size = 0x38000, scoped, tag = 'input window, operand 1, single buffered']
    #allocation6 [shape = 's32[1]{0}', space=sflag, size = 0x4, scoped, tag = 'scoped memory for tpu_custom_call.1']
    #allocation7 [shape = 'u8[4096]{0}', space=vmem, size = 0x1000, scoped, tag = 'input window, operand 2, single buffered']
    #allocation8 [shape = 'u8[4096]{0}', space=vmem, size = 0x1000, scoped, tag = 'output window, operand 0, single buffered']
    %8 = vsyncpa [#allocation3], 0
    %9 = vsyncpa [#allocation6], 0
    %10 = vsyncpa [#allocation4], 0
    // Predicated region
    $region2: #{tpu_custom_call.1} parent=1 // pred_check
      _
    $region3: #{tpu_custom_call.1} parent=1 // pred_check_branch
      %12 = sbr.rel (0) target = $region5
    $region4: #{tpu_custom_call.1} parent=1 // pred_region
      %14 = vsyncadd [#allocation3], 0
      %s16 = sshll.u32 %s0, 4
      %s17 = int_to_ptr.hbm [resolvable:$true] %s16
      %s18 = sshll.u32 [#allocation2], 4
      %s19 = int_to_ptr.vmem [resolvable:$true] %s18
      %21 = dma.hbm_to_vmem [thread:$0]  %s17, 128, %s19, [#allocation3]
    $region5: #{tpu_custom_call.1} parent=1 // pred_fallthru
      _
    // Predicated region
    $region6: #{tpu_custom_call.1} parent=1 // pred_check
      _
    $region7: #{tpu_custom_call.1} parent=1 // pred_check_branch
      %23 = sbr.rel (0) target = $region9
    $region8: #{tpu_custom_call.1} parent=1 // pred_region
      %25 = vsyncadd [#allocation6], 0
      %s26 = sshll.u32 %s1, 4
      %s27 = int_to_ptr.hbm [resolvable:$true] %s26
      %s28 = sshll.u32 [#allocation5], 4
      %s29 = int_to_ptr.vmem [resolvable:$true] %s28
      %34 = dma.hbm_to_vmem [thread:$0]  %s27, 7168, %s29, [#allocation6], 128, 128, 8
    $region9: #{tpu_custom_call.1} parent=1 // pred_fallthru
      _
    // Predicated region
    $region10: #{tpu_custom_call.1} parent=1 // pred_check
      _
    $region11: #{tpu_custom_call.1} parent=1 // pred_check_branch
      %36 = sbr.rel (0) target = $region13
    $region12: #{tpu_custom_call.1} parent=1 // pred_region
      %38 = vsyncadd [#allocation6], 0
      %s40 = sshll.u32 %s2, 4
      %s41 = int_to_ptr.hbm [resolvable:$true] %s40
      %s42 = sshll.u32 [#allocation7], 4
      %s43 = int_to_ptr.vmem [resolvable:$true] %s42
      %45 = dma.hbm_to_vmem [thread:$0]  %s41, 128, %s43, [#allocation6]
    $region13: #{tpu_custom_call.1} parent=1 // pred_fallthru
      _
    // Predicated region
    $region14: #{tpu_custom_call.1} parent=1 // pred_check
      _
    $region15: #{tpu_custom_call.1} parent=1 // pred_check_branch
      %47 = sbr.rel (0) target = $region17
    $region16: #{tpu_custom_call.1} parent=1 // pred_region
      %49 = dma.done [#allocation3], 128
    $region17: #{tpu_custom_call.1} parent=1 // pred_fallthru
      _
    // Predicated region
    $region18: #{tpu_custom_call.1} parent=1 // pred_check
      _
    $region19: #{tpu_custom_call.1} parent=1 // pred_check_branch
      %51 = sbr.rel (0) target = $region21
    $region20: #{tpu_custom_call.1} parent=1 // pred_region
      %53 = dma.done [#allocation6], 7168
    $region21: #{tpu_custom_call.1} parent=1 // pred_fallthru
      _
    // Predicated region
    $region22: #{tpu_custom_call.1} parent=1 // pred_check
      _
    $region23: #{tpu_custom_call.1} parent=1 // pred_check_branch
      %55 = sbr.rel (0) target = $region25
    $region24: #{tpu_custom_call.1} parent=1 // pred_region
      %57 = dma.done [#allocation6], 128
    $region25: #{tpu_custom_call.1} parent=1 // pred_fallthru
      _
    %v58 = vld [vmem:[#allocation2] sm:$0xff]
    %v59 = vld [vmem:[#allocation5] sm:$0xff]
    %v60 = vld [vmem:[#allocation5 + $0x8] sm:$0xff]
    %v61 = vld [vmem:[#allocation5 + $0x10] sm:$0xff]
    %v62 = vld [vmem:[#allocation5 + $0x18] sm:$0xff]
    %v63 = vld [vmem:[#allocation5 + $0x20] sm:$0x1]
    %v64 = vperm.slane %v63, 0
    %vm65 = vcmask 261120
    %v67 = vsel %vm65, %v58, 0
    %69 = vmatpush.msra.mxu0 0.0
    %70 = vmatpush.msra.mxu0 0.0
    %71 = vmatpush.msra.mxu0 0.0
    %72 = vmatpush.msra.mxu0 0.0
    %73 = vmatpush.msra.mxu0 0.0
    %74 = vmatpush.msra.mxu0 0.0
    %75 = vmatpush.msra.mxu0 0.0
    %76 = vmatpush.msra.mxu0 0.0
    %77 = vmatpush.msra.mxu0 0.0
    %78 = vmatpush.msra.mxu0 0.0
    %79 = vmatpush.msra.mxu0 0.0
    %80 = vmatpush.msra.mxu0 0.0
    %81 = vmatpush.msra.mxu0 %v62
    %82 = vmatpush.msra.mxu0 %v61
    %83 = vmatpush.msra.mxu0 %v60
    %84 = vmatpush.msra.mxu0 %v59
    %85 = vmatmul.f32.gmra.mxu0 %v67
    %v86 = vpop.f32.mrf.mxu0
    %v87 = vadd.f32 %v64, %v86
    %88 = vdwg.mxu0
    %v89 = vmax.f32 %v87, 0.0
    %v90 = vld [vmem:[#allocation5 + $0x28] sm:$0xff]
    %v91 = vld [vmem:[#allocation5 + $0x30] sm:$0xff]
    %v92 = vld [vmem:[#allocation5 + $0x38] sm:$0xff]
    %v93 = vld [vmem:[#allocation5 + $0x40] sm:$0xff]
    %v94 = vld [vmem:[#allocation5 + $0x48] sm:$0xff]
    %v95 = vld [vmem:[#allocation5 + $0x50] sm:$0xff]
    %v96 = vld [vmem:[#allocation5 + $0x58] sm:$0xff]
    %v97 = vld [vmem:[#allocation5 + $0x60] sm:$0xff]
    %v98 = vld [vmem:[#allocation5 + $0x68] sm:$0xff]
    %v99 = vld [vmem:[#allocation5 + $0x70] sm:$0xff]
    %v100 = vld [vmem:[#allocation5 + $0x78] sm:$0xff]
    %v101 = vld [vmem:[#allocation5 + $0x80] sm:$0xff]
    %v102 = vld [vmem:[#allocation5 + $0x88] sm:$0xff]
    %v103 = vld [vmem:[#allocation5 + $0x90] sm:$0xff]
    %v104 = vld [vmem:[#allocation5 + $0x98] sm:$0xff]
    %v105 = vld [vmem:[#allocation5 + $0xa0] sm:$0xff]
    %v106 = vld [vmem:[#allocation5 + $0xa8] sm:$0x1]
    %v107 = vperm.slane %v106, 0
    %108 = vmatpush.msra.mxu0 %v105
    %109 = vmatpush.msra.mxu0 %v104
    %110 = vmatpush.msra.mxu0 %v103
    %111 = vmatpush.msra.mxu0 %v102
    %112 = vmatpush.msra.mxu0 %v101
    %113 = vmatpush.msra.mxu0 %v100
    %114 = vmatpush.msra.mxu0 %v99
    %115 = vmatpush.msra.mxu0 %v98
    %116 = vmatpush.msra.mxu0 %v97
    %117 = vmatpush.msra.mxu0 %v96
    %118 = vmatpush.msra.mxu0 %v95
    %119 = vmatpush.msra.mxu0 %v94
    %120 = vmatpush.msra.mxu0 %v93
    %121 = vmatpush.msra.mxu0 %v92
    %122 = vmatpush.msra.mxu0 %v91
    %123 = vmatpush.msra.mxu0 %v90
    %124 = vmatmul.f32.gmra.mxu0 %v89
    %v125 = vpop.f32.mrf.mxu0
    %v126 = vadd.f32 %v107, %v125
    %127 = vdwg.mxu0
    %v128 = vmax.f32 %v126, 0.0
    %v129 = vld [vmem:[#allocation5 + $0xb0] sm:$0xff]
    %v130 = vld [vmem:[#allocation5 + $0xb8] sm:$0xff]
    %v131 = vld [vmem:[#allocation5 + $0xc0] sm:$0xff]
    %v132 = vld [vmem:[#allocation5 + $0xc8] sm:$0xff]
    %v133 = vld [vmem:[#allocation5 + $0xd0] sm:$0xff]
    %v134 = vld [vmem:[#allocation5 + $0xd8] sm:$0xff]
    %v135 = vld [vmem:[#allocation5 + $0xe0] sm:$0xff]
    %v136 = vld [vmem:[#allocation5 + $0xe8] sm:$0xff]
    %v137 = vld [vmem:[#allocation5 + $0xf0] sm:$0xff]
    %v138 = vld [vmem:[#allocation5 + $0xf8] sm:$0xff]
    %v139 = vld [vmem:[#allocation5 + $0x100] sm:$0xff]
    %v140 = vld [vmem:[#allocation5 + $0x108] sm:$0xff]
    %v141 = vld [vmem:[#allocation5 + $0x110] sm:$0xff]
    %v142 = vld [vmem:[#allocation5 + $0x118] sm:$0xff]
    %v143 = vld [vmem:[#allocation5 + $0x120] sm:$0xff]
    %v144 = vld [vmem:[#allocation5 + $0x128] sm:$0xff]
    %v145 = vld [vmem:[#allocation5 + $0x130] sm:$0x1]
    %v146 = vperm.slane %v145, 0
    %147 = vmatpush.msra.mxu0 %v144
    %148 = vmatpush.msra.mxu0 %v143
    %149 = vmatpush.msra.mxu0 %v142
    %150 = vmatpush.msra.mxu0 %v141
    %151 = vmatpush.msra.mxu0 %v140
    %152 = vmatpush.msra.mxu0 %v139
    %153 = vmatpush.msra.mxu0 %v138
    %154 = vmatpush.msra.mxu0 %v137
    %155 = vmatpush.msra.mxu0 %v136
    %156 = vmatpush.msra.mxu0 %v135
    %157 = vmatpush.msra.mxu0 %v134
    %158 = vmatpush.msra.mxu0 %v133
    %159 = vmatpush.msra.mxu0 %v132
    %160 = vmatpush.msra.mxu0 %v131
    %161 = vmatpush.msra.mxu0 %v130
    %162 = vmatpush.msra.mxu0 %v129
    %163 = vmatmul.f32.gmra.mxu0 %v128
    %v164 = vpop.f32.mrf.mxu0
    %v165 = vadd.f32 %v146, %v164
    %166 = vdwg.mxu0
    %v167 = vld [vmem:[#allocation5 + $0x138] sm:$0xff]
    %v168 = vld [vmem:[#allocation5 + $0x140] sm:$0xff]
    %v169 = vld [vmem:[#allocation5 + $0x148] sm:$0xff]
    %v170 = vld [vmem:[#allocation5 + $0x150] sm:$0xff]
    %v171 = vld [vmem:[#allocation5 + $0x158] sm:$0xff]
    %v172 = vld [vmem:[#allocation5 + $0x160] sm:$0xff]
    %v173 = vld [vmem:[#allocation5 + $0x168] sm:$0xff]
    %v174 = vld [vmem:[#allocation5 + $0x170] sm:$0xff]
    %v175 = vld [vmem:[#allocation5 + $0x178] sm:$0xff]
    %v176 = vld [vmem:[#allocation5 + $0x180] sm:$0xff]
    %v177 = vld [vmem:[#allocation5 + $0x188] sm:$0xff]
    %v178 = vld [vmem:[#allocation5 + $0x190] sm:$0xff]
    %v179 = vld [vmem:[#allocation5 + $0x198] sm:$0xff]
    %v180 = vld [vmem:[#allocation5 + $0x1a0] sm:$0xff]
    %v181 = vld [vmem:[#allocation5 + $0x1a8] sm:$0xff]
    %v182 = vld [vmem:[#allocation5 + $0x1b0] sm:$0xff]
    %v183 = vld [vmem:[#allocation5 + $0x1b8] sm:$0x1]
    %v184 = vperm.slane %v183, 0
    %185 = vmatpush.msra.mxu0 %v182
    %186 = vmatpush.msra.mxu0 %v181
    %187 = vmatpush.msra.mxu0 %v180
    %188 = vmatpush.msra.mxu0 %v179
    %189 = vmatpush.msra.mxu0 %v178
    %190 = vmatpush.msra.mxu0 %v177
    %191 = vmatpush.msra.mxu0 %v176
    %192 = vmatpush.msra.mxu0 %v175
    %193 = vmatpush.msra.mxu0 %v174
    %194 = vmatpush.msra.mxu0 %v173
    %195 = vmatpush.msra.mxu0 %v172
    %196 = vmatpush.msra.mxu0 %v171
    %197 = vmatpush.msra.mxu0 %v170
    %198 = vmatpush.msra.mxu0 %v169
    %199 = vmatpush.msra.mxu0 %v168
    %200 = vmatpush.msra.mxu0 %v167
    %201 = vmatmul.f32.gmra.mxu0 %v128
    %v202 = vpop.f32.mrf.mxu0
    %v203 = vadd.f32 %v184, %v202
    %204 = vdwg.mxu0
    %v205 = vld [vmem:[#allocation7] sm:$0xff]
    %v206 = vmul.f32 %v203, 0.5
    %v207 = vmul.f32 %v206, 1.442695
    %v208 = vpow.pop %v207
    %v209 = vmul.f32 %v205, %v208
    %v210 = vadd.f32 %v209, %v165
    %211 = vrot.lane.b32.xlu0 %v203, 16
    %v212 = vpop.permute.xlu0 %211
    %v213 = vadd.f32 %v165, %v212
    %214 = vst [vmem:[#allocation8] sm:$0xff] %v213
    %216 = vrot.lane.b32.xlu0 %v210, 32
    %v217 = vpop.permute.xlu0 %216
    %vm219 = vcmask 392448
    %220 = vst.msk [vmem:[#allocation8] sm:$0xff] %vm219, %v217
    // Predicated region
    $region26: #{tpu_custom_call.1} parent=1 // pred_check
      _
    $region27: #{tpu_custom_call.1} parent=1 // pred_check_branch
      %222 = sbr.rel (0) target = $region29
    $region28: #{tpu_custom_call.1} parent=1 // pred_region
      %224 = vsyncadd [#allocation4], 0
      %s226 = sshll.u32 [#allocation8], 4
      %s227 = int_to_ptr.vmem [resolvable:$true] %s226
      %s228 = sshll.u32 %s3, 4
      %s229 = int_to_ptr.hbm [resolvable:$true] %s228
      %231 = dma.vmem_to_hbm [thread:$0]  %s227, 128, %s229, [#allocation4]
    $region29: #{tpu_custom_call.1} parent=1 // pred_fallthru
      _
    // Predicated region
    $region30: #{tpu_custom_call.1} parent=1 // pred_check
      _
    $region31: #{tpu_custom_call.1} parent=1 // pred_check_branch
      %233 = sbr.rel (0) target = $region33
    $region32: #{tpu_custom_call.1} parent=1 // pred_region
      %235 = dma.done [#allocation4], 128
    $region33: #{tpu_custom_call.1} parent=1 // pred_fallthru
      _
    %236 = vsyncpa [#allocation3], 1
    %237 = vsyncpa [#allocation6], 1
    %238 = vsyncpa [#allocation4], 1

</llo_original>
